<compile_context>
chip_gen: v5e
topology: v5e:2x2
jax: 0.10.0
libtpu: 0.0.40
codegen_flags: <defaults>
</compile_context>

<pallas_src>
import functools

import jax
import jax.numpy as jnp
from jax.experimental import pallas as pl
from jax.experimental.pallas import tpu as pltpu


def _ffn_kernel(x_ref, w1_ref, b1_ref, w2_ref, b2_ref, o_ref, *, mxu_bf16):
    # x_ref block: (row_tile, E); weights/biases fully resident in VMEM.
    x = x_ref[...]
    w1 = w1_ref[...]
    w2 = w2_ref[...]

    if mxu_bf16:
        x = x.astype(jnp.bfloat16)
        w1 = w1.astype(jnp.bfloat16)
        w2 = w2.astype(jnp.bfloat16)

    # Linear 1 + bias + ReLU (MXU matmul, f32 accumulation).
    h = jnp.dot(x, w1, preferred_element_type=jnp.float32) + b1_ref[...]   # (rt, 4E)
    h = jnp.maximum(h, 0.0)

    if mxu_bf16:
        h = h.astype(jnp.bfloat16)

    # Linear 2 + bias.  Dropout = identity (inference).
    y = jnp.dot(h, w2, preferred_element_type=jnp.float32) + b2_ref[...]    # (rt, E)
    o_ref[...] = y.astype(o_ref.dtype)


def feed_forward(x, params, *, mxu_bf16=False, row_tile=None):
    """x: (B, T, E) float32 -> (B, T, E) float32.  params = (w1, b1, w2, b2)."""
    B, T, E = x.shape
    w1, b1, w2, b2 = params
    H = w1.shape[1]                      # 4 * E

    # Fold batch into rows -> one sublane-dense slab.
    rows = B * T
    x2 = x.reshape(rows, E)

    if row_tile is None:
        # Big tiles amortize per-step overhead; clamp to the (8-aligned) row count for
        # tiny inputs so we don't pad more than necessary.
        row_tile = min(512, -(-rows // 8) * 8)

    # Pad rows up to a multiple of the tile so the grid divides evenly.
    prows = -(-rows // row_tile) * row_tile
    pad = prows - rows
    if pad:
        x2 = jnp.pad(x2, ((0, pad), (0, 0)))

    grid = (prows // row_tile,)
    kernel = functools.partial(_ffn_kernel, mxu_bf16=mxu_bf16)

    # Rough VMEM footprint: double-buffered x/out tiles + resident weights/biases
    # + the (rt, H) f32 intermediate.  Raise the scoped limit only if needed.
    est_bytes = (
        2 * 2 * row_tile * E * 4          # x + out, double buffered
        + 2 * (E * H + H + H * E + E) * 4  # weights + biases (2 buffers each)
        + row_tile * H * 4                 # hidden intermediate
    )
    compiler_kwargs = {"dimension_semantics": ("parallel",)}
    if est_bytes > 24 * 1024 * 1024:
        compiler_kwargs["vmem_limit_bytes"] = min(int(est_bytes * 1.5), 56 * 1024 * 1024)

    out = pl.pallas_call(
        kernel,
        out_shape=jax.ShapeDtypeStruct((prows, E), x.dtype),
        grid_spec=pltpu.PrefetchScalarGridSpec(
            num_scalar_prefetch=0,
            grid=grid,
            in_specs=[
                pl.BlockSpec((row_tile, E), lambda i: (i, 0)),   # x rows
                pl.BlockSpec((E, H), lambda i: (0, 0)),          # W1 (resident)
                pl.BlockSpec((1, H), lambda i: (0, 0)),          # b1
                pl.BlockSpec((H, E), lambda i: (0, 0)),          # W2 (resident)
                pl.BlockSpec((1, E), lambda i: (0, 0)),          # b2
            ],
            out_specs=pl.BlockSpec((row_tile, E), lambda i: (i, 0)),
        ),
        compiler_params=pltpu.CompilerParams(**compiler_kwargs),
    )(x2, w1, b1, w2, b2)

    if pad:
        out = out[:rows]
    return out.reshape(B, T, E)


def reference(x, params):
    """Plain-JAX reference mirroring the PyTorch forward (dropout = identity)."""
    w1, b1, w2, b2 = params
    h = jnp.maximum(x @ w1 + b1, 0.0)
    return h @ w2 + b2


def init_params(key, n_embed):
    hidden = 4 * n_embed
    ks = jax.random.split(key, 4)
    s1 = 1.0 / jnp.sqrt(n_embed)
    s2 = 1.0 / jnp.sqrt(hidden)
    w1 = jax.random.normal(ks[0], (n_embed, hidden), jnp.float32) * s1
    b1 = jax.random.normal(ks[1], (1, hidden), jnp.float32) * s1
    w2 = jax.random.normal(ks[2], (hidden, n_embed), jnp.float32) * s2
    b2 = jax.random.normal(ks[3], (1, n_embed), jnp.float32) * s2
    return (w1, b1, w2, b2)


if __name__ == "__main__":
    # Module-consistent small shapes: batch=2, seq=8, n_embed=32 (hidden = 4*32 = 128).
    B, T, E = 2, 8, 32

    key = jax.random.PRNGKey(0)
    kx, kp = jax.random.split(key)
    x = jax.random.normal(kx, (B, T, E), jnp.float32)
    params = init_params(kp, E)

    ref = reference(x, params)

    # f32 MXU path (exact).
    out = feed_forward(x, params, mxu_bf16=False)
    out = jax.block_until_ready(out)
    assert out.shape == (B, T, E)
    assert jnp.allclose(out, ref, atol=1e-5, rtol=1e-5), "f32 path mismatch vs JAX reference"

    # bf16 MXU-operand path (v6e/v7x throughput) — looser tolerance for bf16 rounding.
    out_bf16 = feed_forward(x, params, mxu_bf16=True)
    out_bf16 = jax.block_until_ready(out_bf16)
    assert jnp.allclose(out_bf16, ref, atol=2e-2, rtol=2e-2), "bf16 path mismatch vs JAX reference"

    print("KERNEL_OK")
</pallas_src>

<mosaic_0001>
module attributes {stable_mosaic.version = 11 : i64} {
  func.func @_ffn_kernel(%arg0: i32, %arg1: memref<16x32xf32, #tpu.memory_space<vmem>>, %arg2: memref<32x128xf32, #tpu.memory_space<vmem>>, %arg3: memref<1x128xf32, #tpu.memory_space<vmem>>, %arg4: memref<128x32xf32, #tpu.memory_space<vmem>>, %arg5: memref<1x32xf32, #tpu.memory_space<vmem>>, %arg6: memref<16x32xf32, #tpu.memory_space<vmem>>) attributes {dimension_semantics = [#tpu.dimension_semantics<parallel>], iteration_bounds = array<i64: 1>, scalar_prefetch = 0 : i64, scratch_operands = 0 : i64, tpu.core_type = #tpu.core_type<tc>, window_params = [{transform_indices = @transform_0, window_bounds = array<i64: 16, 32>}, {pipeline_mode = #tpu.pipeline_mode<synchronous>, transform_indices = @transform_1, window_bounds = array<i64: 32, 128>}, {pipeline_mode = #tpu.pipeline_mode<synchronous>, transform_indices = @transform_2, window_bounds = array<i64: 1, 128>}, {pipeline_mode = #tpu.pipeline_mode<synchronous>, transform_indices = @transform_3, window_bounds = array<i64: 128, 32>}, {pipeline_mode = #tpu.pipeline_mode<synchronous>, transform_indices = @transform_4, window_bounds = array<i64: 1, 32>}, {transform_indices = @transform_5, window_bounds = array<i64: 16, 32>}]} {
    %c0 = arith.constant 0 : index
    %c0_0 = arith.constant 0 : index
    %0 = vector.load %arg1[%c0, %c0_0] : memref<16x32xf32, #tpu.memory_space<vmem>>, vector<16x32xf32>
    %c0_1 = arith.constant 0 : index
    %c0_2 = arith.constant 0 : index
    %1 = vector.load %arg2[%c0_1, %c0_2] : memref<32x128xf32, #tpu.memory_space<vmem>>, vector<32x128xf32>
    %c0_3 = arith.constant 0 : index
    %c0_4 = arith.constant 0 : index
    %2 = vector.load %arg4[%c0_3, %c0_4] : memref<128x32xf32, #tpu.memory_space<vmem>>, vector<128x32xf32>
    %cst = arith.constant dense<0.000000e+00> : vector<16x128xf32>
    %3 = tpu.matmul %0, %1, %cst {dimension_numbers = #tpu.dot_dimension_numbers<[1], [0], [0], [1], [0, 0, 1, 1], [], []>} : vector<16x32xf32>, vector<32x128xf32>, vector<16x128xf32> -> vector<16x128xf32>
    %c0_5 = arith.constant 0 : index
    %c0_6 = arith.constant 0 : index
    %4 = vector.load %arg3[%c0_5, %c0_6] : memref<1x128xf32, #tpu.memory_space<vmem>>, vector<1x128xf32>
    %5 = vector.broadcast %4 : vector<1x128xf32> to vector<16x128xf32>
    %6 = arith.addf %3, %5 : vector<16x128xf32>
    %cst_7 = arith.constant 0.000000e+00 : f32
    %7 = vector.broadcast %cst_7 : f32 to vector<16x128xf32>
    %8 = arith.maximumf %6, %7 : vector<16x128xf32>
    %cst_8 = arith.constant dense<0.000000e+00> : vector<16x32xf32>
    %9 = tpu.matmul %8, %2, %cst_8 {dimension_numbers = #tpu.dot_dimension_numbers<[1], [0], [0], [1], [0, 0, 1, 1], [], []>} : vector<16x128xf32>, vector<128x32xf32>, vector<16x32xf32> -> vector<16x32xf32>
    %c0_9 = arith.constant 0 : index
    %c0_10 = arith.constant 0 : index
    %10 = vector.load %arg5[%c0_9, %c0_10] : memref<1x32xf32, #tpu.memory_space<vmem>>, vector<1x32xf32>
    %11 = vector.broadcast %10 : vector<1x32xf32> to vector<16x32xf32>
    %12 = arith.addf %9, %11 : vector<16x32xf32>
    %c0_11 = arith.constant 0 : index
    %c0_12 = arith.constant 0 : index
    %13 = vector.load %arg6[%c0_11, %c0_12] : memref<16x32xf32, #tpu.memory_space<vmem>>, vector<16x32xf32>
    tpu.vector_store %arg6[%c0_11, %c0_12], %12 {strides = array<i32>} : memref<16x32xf32, #tpu.memory_space<vmem>>, vector<16x32xf32>,
    return
  }
  func.func @transform_0(%arg0: i32) -> (i32, i32) {
    %c0_i32 = arith.constant 0 : i32
    %c0_i32_0 = arith.constant 0 : i32
    return %arg0, %c0_i32 : i32, i32
  }
  func.func @transform_1(%arg0: i32) -> (i32, i32) {
    %c0_i32 = arith.constant 0 : i32
    %c0_i32_0 = arith.constant 0 : i32
    %c0_i32_1 = arith.constant 0 : i32
    return %c0_i32, %c0_i32_0 : i32, i32
  }
  func.func @transform_2(%arg0: i32) -> (i32, i32) {
    %c0_i32 = arith.constant 0 : i32
    %c0_i32_0 = arith.constant 0 : i32
    %c0_i32_1 = arith.constant 0 : i32
    return %c0_i32, %c0_i32_0 : i32, i32
  }
  func.func @transform_3(%arg0: i32) -> (i32, i32) {
    %c0_i32 = arith.constant 0 : i32
    %c0_i32_0 = arith.constant 0 : i32
    %c0_i32_1 = arith.constant 0 : i32
    return %c0_i32, %c0_i32_0 : i32, i32
  }
  func.func @transform_4(%arg0: i32) -> (i32, i32) {
    %c0_i32 = arith.constant 0 : i32
    %c0_i32_0 = arith.constant 0 : i32
    %c0_i32_1 = arith.constant 0 : i32
    return %c0_i32, %c0_i32_0 : i32, i32
  }
  func.func @transform_5(%arg0: i32) -> (i32, i32) {
    %c0_i32 = arith.constant 0 : i32
    %c0_i32_0 = arith.constant 0 : i32
    return %arg0, %c0_i32 : i32, i32
  }
}

</mosaic_0001>

<llo_original>
// kernel: tpu_custom_call.1
$region0: #{tpu_custom_call.1}
  #allocation0 [shape = 'u32[]', space=smem, size = 0x4, offset = 0x4, fixed_abs, tag = 'smem constant byte address 0x4 - core index']
  #allocation1 [shape = 'u32[72,128]{1,0:T(1,128)}', space=vmem, size = 0x9000, scoped, tag = 'internal scratch']
  %s0 = inlined_call_operand.vmem [shape: f32[16,32], index: 0, kind: input, shape index: {}]
  %s1 = inlined_call_operand.vmem [shape: f32[32,128], index: 1, kind: input, shape index: {}]
  %s2 = inlined_call_operand.vmem [shape: f32[1,128], index: 2, kind: input, shape index: {}]
  %s3 = inlined_call_operand.vmem [shape: f32[128,32], index: 3, kind: input, shape index: {}]
  %s4 = inlined_call_operand.vmem [shape: f32[1,32], index: 4, kind: input, shape index: {}]
  %s5 = inlined_call_operand.hbm [shape: f32[16,32], index: 5, kind: output, shape index: {}]
  %s6 = sld [smem:[#allocation0]]
  $region30: #{tpu_custom_call.1} parent=0
    _
  %s8 = ssub.s32 1, %s6
  %s9 = scalar_select 0, %s8, %s6
  $region1: #{tpu_custom_call.1} parent=0
    #allocation2 [shape = 'u8[8192]{0}', space=vmem, size = 0x2000, scoped, tag = 'output window, operand 0, single buffered']
    #allocation3 [shape = 's32[1]{0}', space=sflag, size = 0x4, scoped, tag = 'scoped memory for tpu_custom_call.1']
    %10 = vsyncpa [#allocation3], 0
    // Predicated region
    $region2: #{tpu_custom_call.1} parent=1 // pred_check
      _
    $region3: #{tpu_custom_call.1} parent=1 // pred_check_branch
      %12 = sbr.rel (0) target = $region5
    $region4: #{tpu_custom_call.1} parent=1 // pred_region
      _
    $region5: #{tpu_custom_call.1} parent=1 // pred_fallthru
      _
    // Predicated region
    $region6: #{tpu_custom_call.1} parent=1 // pred_check
      _
    $region7: #{tpu_custom_call.1} parent=1 // pred_check_branch
      %14 = sbr.rel (0) target = $region9
    $region8: #{tpu_custom_call.1} parent=1 // pred_region
      _
    $region9: #{tpu_custom_call.1} parent=1 // pred_fallthru
      _
    // Predicated region
    $region10: #{tpu_custom_call.1} parent=1 // pred_check
      _
    $region11: #{tpu_custom_call.1} parent=1 // pred_check_branch
      %16 = sbr.rel (0) target = $region13
    $region12: #{tpu_custom_call.1} parent=1 // pred_region
      _
    $region13: #{tpu_custom_call.1} parent=1 // pred_fallthru
      _
    // Predicated region
    $region14: #{tpu_custom_call.1} parent=1 // pred_check
      _
    $region15: #{tpu_custom_call.1} parent=1 // pred_check_branch
      %18 = sbr.rel (0) target = $region17
    $region16: #{tpu_custom_call.1} parent=1 // pred_region
      _
    $region17: #{tpu_custom_call.1} parent=1 // pred_fallthru
      _
    // Predicated region
    $region18: #{tpu_custom_call.1} parent=1 // pred_check
      _
    $region19: #{tpu_custom_call.1} parent=1 // pred_check_branch
      %20 = sbr.rel (0) target = $region21
    $region20: #{tpu_custom_call.1} parent=1 // pred_region
      _
    $region21: #{tpu_custom_call.1} parent=1 // pred_fallthru
      _
    %v21 = vld [vmem:[%s0] sm:$0xff]
    %v22 = vld [vmem:[%s0 + $0x8] sm:$0xff]
    %v23 = vld [vmem:[%s1] sm:$0xff]
    %v24 = vld [vmem:[%s1 + $0x8] sm:$0xff]
    %v25 = vld [vmem:[%s1 + $0x10] sm:$0xff]
    %v26 = vld [vmem:[%s1 + $0x18] sm:$0xff]
    %v27 = vld [vmem:[%s3] sm:$0xff]
    %v28 = vld [vmem:[%s3 + $0x8] sm:$0xff]
    %v29 = vld [vmem:[%s3 + $0x10] sm:$0xff]
    %v30 = vld [vmem:[%s3 + $0x18] sm:$0xff]
    %v31 = vld [vmem:[%s3 + $0x20] sm:$0xff]
    %v32 = vld [vmem:[%s3 + $0x28] sm:$0xff]
    %v33 = vld [vmem:[%s3 + $0x30] sm:$0xff]
    %v34 = vld [vmem:[%s3 + $0x38] sm:$0xff]
    %v35 = vld [vmem:[%s3 + $0x40] sm:$0xff]
    %v36 = vld [vmem:[%s3 + $0x48] sm:$0xff]
    %v37 = vld [vmem:[%s3 + $0x50] sm:$0xff]
    %v38 = vld [vmem:[%s3 + $0x58] sm:$0xff]
    %v39 = vld [vmem:[%s3 + $0x60] sm:$0xff]
    %v40 = vld [vmem:[%s3 + $0x68] sm:$0xff]
    %v41 = vld [vmem:[%s3 + $0x70] sm:$0xff]
    %v42 = vld [vmem:[%s3 + $0x78] sm:$0xff]
    %v43 = vld [vmem:[%s2] sm:$0x1]
    %v45 = vperm.slane %v43, 0
    %vm47 = vcmask 261120
    %v49 = vsel %vm47, %v21, 0
    %v52 = vsel %vm47, %v22, 0
    %54 = vmatpush.msra.mxu0 0.0
    %55 = vmatpush.msra.mxu0 0.0
    %56 = vmatpush.msra.mxu0 0.0
    %57 = vmatpush.msra.mxu0 0.0
    %58 = vmatpush.msra.mxu0 0.0
    %59 = vmatpush.msra.mxu0 0.0
    %60 = vmatpush.msra.mxu0 0.0
    %61 = vmatpush.msra.mxu0 0.0
    %62 = vmatpush.msra.mxu0 0.0
    %63 = vmatpush.msra.mxu0 0.0
    %64 = vmatpush.msra.mxu0 0.0
    %65 = vmatpush.msra.mxu0 0.0
    %66 = vmatpush.msra.mxu0 %v26
    %67 = vmatpush.msra.mxu0 %v25
    %68 = vmatpush.msra.mxu0 %v24
    %69 = vmatpush.msra.mxu0 %v23
    %70 = vmatmul.f32.gmra.mxu0 %v49
    %v71 = vpop.f32.mrf.mxu0
    %v72 = vadd.f32 %v45, %v71
    %73 = vmatmul.f32.gmra.mxu0 %v52
    %v74 = vpop.f32.mrf.mxu0
    %v75 = vadd.f32 %v45, %v74
    %76 = vdwg.mxu0
    %v77 = vmax.f32 %v72, 0.0
    %v78 = vmax.f32 %v75, 0.0
    %v79 = vld [vmem:[%s4] sm:$0x1]
    %v81 = vperm.slane %v79, 0
    %83 = vmatpush.msra.mxu0 %v42
    %84 = vmatpush.msra.mxu0 %v41
    %85 = vmatpush.msra.mxu0 %v40
    %86 = vmatpush.msra.mxu0 %v39
    %87 = vmatpush.msra.mxu0 %v38
    %88 = vmatpush.msra.mxu0 %v37
    %89 = vmatpush.msra.mxu0 %v36
    %90 = vmatpush.msra.mxu0 %v35
    %91 = vmatpush.msra.mxu0 %v34
    %92 = vmatpush.msra.mxu0 %v33
    %93 = vmatpush.msra.mxu0 %v32
    %94 = vmatpush.msra.mxu0 %v31
    %95 = vmatpush.msra.mxu0 %v30
    %96 = vmatpush.msra.mxu0 %v29
    %97 = vmatpush.msra.mxu0 %v28
    %98 = vmatpush.msra.mxu0 %v27
    %99 = vmatmul.f32.gmra.mxu0 %v77
    %v100 = vpop.f32.mrf.mxu0
    %v101 = vadd.f32 %v81, %v100
    %102 = vmatmul.f32.gmra.mxu0 %v78
    %v103 = vpop.f32.mrf.mxu0
    %v104 = vadd.f32 %v81, %v103
    %105 = vdwg.mxu0
    %106 = vst.msk [vmem:[#allocation2] sm:$0xff] %vm47, %v101
    %107 = vst.msk [vmem:[#allocation2 + $0x8] sm:$0xff] %vm47, %v104
    // Predicated region
    $region22: #{tpu_custom_call.1} parent=1 // pred_check
      _
    $region23: #{tpu_custom_call.1} parent=1 // pred_check_branch
      %109 = sbr.rel (0) target = $region25
    $region24: #{tpu_custom_call.1} parent=1 // pred_region
      %111 = vsyncadd [#allocation3], 0
      %s112 = sshll.u32 [#allocation2], 4
      %s113 = int_to_ptr.vmem [resolvable:$true] %s112
      %s114 = sshll.u32 %s5, 4
      %s115 = int_to_ptr.hbm [resolvable:$true] %s114
      %120 = dma.vmem_to_hbm [thread:$0]  %s113, 256, %s115, [#allocation3], 128, 128, 8
    $region25: #{tpu_custom_call.1} parent=1 // pred_fallthru
      _
    // Predicated region
    $region26: #{tpu_custom_call.1} parent=1 // pred_check
      _
    $region27: #{tpu_custom_call.1} parent=1 // pred_check_branch
      %122 = sbr.rel (0) target = $region29
    $region28: #{tpu_custom_call.1} parent=1 // pred_region
      %124 = dma.done [#allocation3], 256
    $region29: #{tpu_custom_call.1} parent=1 // pred_fallthru
      _
    %125 = vsyncpa [#allocation3], 1

</llo_original>
